<compile_context>
chip_gen: v6e
topology: v6e:2x2x1
jax: 0.10.0
libtpu: 0.0.40
codegen_flags: <defaults>
</compile_context>

<pallas_src>
import jax
import jax.numpy as jnp
from jax.experimental import pallas as pl
from jax.experimental.pallas import tpu as pltpu

# ----- model hyperparameters (mirrors the PyTorch module) -----
CONTEXT_LENGTH = 3
EMBEDDING_SIZE = 48
HIDDEN_SIZE = 512
VOCAB_SIZE = 27          # synthetic vocab (e.g. a-z + newline); train.txt not read
VOCAB_PAD = 128          # lane-padded output / second-matmul N dimension
WTE_ROWS = 32            # vocab rows padded to a sublane multiple for the one-hot matmul


def _round_up(x, m):
    return ((x + m - 1) // m) * m


def mlp_kernel(idx_ref, wte_ref, w1_ref, b1_ref, w2_ref, b2_ref, out_ref):
    """One batch tile: one-hot embedding gather -> Linear -> tanh -> Linear (lane-padded)."""
    tb, t_ctx = idx_ref.shape
    v_rows, emb = wte_ref.shape
    hidden = w1_ref.shape[1]

    # iota over the (padded) vocab lanes; reused for every context position.
    vocab_iota = jax.lax.broadcasted_iota(jnp.int32, (tb, v_rows), 1)

    # h = sum_t onehot(idx[:, t]) @ wte @ W1[t*E:(t+1)*E, :]   (split-K, f32 accumulate)
    h = jnp.zeros((tb, hidden), jnp.float32)
    for t in range(t_ctx):                                   # static unroll, t_ctx == 3
        idx_t = idx_ref[:, t:t + 1]                          # (tb, 1) int32
        onehot = (vocab_iota == idx_t).astype(jnp.float32)   # (tb, V) exact 0/1
        emb_t = jnp.dot(onehot, wte_ref[...],
                        preferred_element_type=jnp.float32)  # (tb, E) == exact wte rows
        w1_t = w1_ref[t * emb:(t + 1) * emb, :]              # (E, H) bf16, static slice
        h = h + jnp.dot(emb_t.astype(w1_t.dtype), w1_t,
                        preferred_element_type=jnp.float32)

    h = jnp.tanh(h + b1_ref[...])                            # f32 epilogue (v5e-safe)
    logits = jnp.dot(h.astype(w2_ref.dtype), w2_ref[...],
                     preferred_element_type=jnp.float32)     # (tb, 128) lane-dense
    out_ref[...] = logits + b2_ref[...]


def mlp_pallas(idx, wte, w1, b1, w2, b2, *, batch_tile=256):
    """idx: (B, T) int32.  wte: (32, 48) f32.  w1: (T*E, H) bf16, b1: (1, H) f32,
    w2: (H, 128) bf16, b2: (1, 128) f32.  Returns (B, 128) f32 padded logits."""
    B, T = idx.shape
    Vw, E = wte.shape
    H = w1.shape[1]
    Vp = w2.shape[1]

    tb = min(batch_tile, _round_up(max(B, 1), 8))            # batch tile (multiple of 8)
    Bp = _round_up(B, tb)
    if Bp != B:
        idx = jnp.pad(idx, ((0, Bp - B), (0, 0)))            # pad rows gather row 0; sliced off

    out = pl.pallas_call(
        mlp_kernel,
        out_shape=jax.ShapeDtypeStruct((Bp, Vp), jnp.float32),
        grid=(Bp // tb,),
        in_specs=[
            pl.BlockSpec((tb, T), lambda i: (i, 0)),         # batch-tiled token ids
            pl.BlockSpec((Vw, E), lambda i: (0, 0)),         # weights: resident in VMEM
            pl.BlockSpec((T * E, H), lambda i: (0, 0)),
            pl.BlockSpec((1, H), lambda i: (0, 0)),
            pl.BlockSpec((H, Vp), lambda i: (0, 0)),
            pl.BlockSpec((1, Vp), lambda i: (0, 0)),
        ],
        out_specs=pl.BlockSpec((tb, Vp), lambda i: (i, 0)),
        compiler_params=pltpu.CompilerParams(
            dimension_semantics=("parallel",)),              # independent batch tiles
    )(idx, wte, w1, b1, w2, b2)
    return out[:B]


def init_params(key):
    """Deterministic init mirroring MLP.reinit: wte ~ N(0,1), linears ~ U(-scale, scale)."""
    k_wte, k_w1, k_b1, k_w2, k_b2 = jax.random.split(key, 5)
    wte = jax.random.normal(k_wte, (VOCAB_SIZE, EMBEDDING_SIZE), jnp.float32)
    wte = jnp.pad(wte, ((0, WTE_ROWS - VOCAB_SIZE), (0, 0)))  # pad rows (never selected)

    d_in = CONTEXT_LENGTH * EMBEDDING_SIZE
    s1 = d_in ** (-0.5)
    # stored transposed relative to torch: (in_features, out_features)
    w1 = jax.random.uniform(k_w1, (d_in, HIDDEN_SIZE), jnp.float32, -s1, s1)
    b1 = jax.random.uniform(k_b1, (1, HIDDEN_SIZE), jnp.float32, -s1, s1)

    s2 = HIDDEN_SIZE ** (-0.5)
    w2 = jax.random.uniform(k_w2, (HIDDEN_SIZE, VOCAB_SIZE), jnp.float32, -s2, s2)
    b2 = jax.random.uniform(k_b2, (1, VOCAB_SIZE), jnp.float32, -s2, s2)
    # lane-pad the output projection with 0-columns to 128; sliced off in forward().
    w2 = jnp.pad(w2, ((0, 0), (0, VOCAB_PAD - VOCAB_SIZE)))
    b2 = jnp.pad(b2, ((0, 0), (0, VOCAB_PAD - VOCAB_SIZE)))

    # bf16 weights for the MXU (f32 accumulation in-kernel); biases / wte stay f32.
    return wte, w1.astype(jnp.bfloat16), b1, w2.astype(jnp.bfloat16), b2


def forward(params, idx, targets=None, *, batch_tile=256):
    """Matches MLP.forward: returns (logits, loss)."""
    wte, w1, b1, w2, b2 = params
    logits = mlp_pallas(idx, wte, w1, b1, w2, b2, batch_tile=batch_tile)[:, :VOCAB_SIZE]

    loss = None
    if targets is not None:
        # TODO(synk): the loss (log_softmax + NLL) stays as plain-JAX glue because
        # forward() must also return the full logits tensor, so fusing it into the
        # kernel epilogue would not remove the logits write-back.
        logp = jax.nn.log_softmax(logits, axis=-1)
        loss = -jnp.mean(jnp.take_along_axis(logp, targets[:, None], axis=-1))
    return logits, loss


def _reference_logits(params, idx):
    """Pure-JAX reference of the same mixed-precision math (gather is exact f32)."""
    wte, w1, b1, w2, b2 = params
    B = idx.shape[0]
    emb = jnp.take(wte, idx, axis=0).reshape(B, -1)
    h = jnp.tanh(jnp.dot(emb.astype(jnp.bfloat16), w1,
                         preferred_element_type=jnp.float32) + b1)
    logits = jnp.dot(h.astype(jnp.bfloat16), w2,
                     preferred_element_type=jnp.float32) + b2
    return logits[:, :VOCAB_SIZE]


if __name__ == "__main__":
    params = init_params(jax.random.PRNGKey(0))

    # --- small batch (single grid step) ---
    B = 2
    k_idx, k_tgt = jax.random.split(jax.random.PRNGKey(1))
    idx = jax.random.randint(k_idx, (B, CONTEXT_LENGTH), 0, VOCAB_SIZE, jnp.int32)
    targets = jax.random.randint(k_tgt, (B,), 0, VOCAB_SIZE, jnp.int32)

    logits, loss = forward(params, idx, targets)
    jax.block_until_ready((logits, loss))

    ref = _reference_logits(params, idx)
    assert logits.shape == (B, VOCAB_SIZE)
    assert bool(jnp.isfinite(loss))
    assert jnp.allclose(logits, ref, atol=1e-2, rtol=1e-2)

    # --- uneven batch with a small tile: exercises padding + multi-step parallel grid ---
    B2 = 50
    k_idx2, k_tgt2 = jax.random.split(jax.random.PRNGKey(2))
    idx2 = jax.random.randint(k_idx2, (B2, CONTEXT_LENGTH), 0, VOCAB_SIZE, jnp.int32)
    targets2 = jax.random.randint(k_tgt2, (B2,), 0, VOCAB_SIZE, jnp.int32)

    logits2, loss2 = forward(params, idx2, targets2, batch_tile=16)
    jax.block_until_ready((logits2, loss2))

    ref2 = _reference_logits(params, idx2)
    assert logits2.shape == (B2, VOCAB_SIZE)
    assert bool(jnp.isfinite(loss2))
    assert jnp.allclose(logits2, ref2, atol=1e-2, rtol=1e-2)

    print("KERNEL_OK")
</pallas_src>

<mosaic_0001>
module attributes {stable_mosaic.version = 11 : i64} {
  func.func @mlp_kernel(%arg0: i32, %arg1: memref<8x3xi32, #tpu.memory_space<vmem>>, %arg2: memref<32x48xf32, #tpu.memory_space<vmem>>, %arg3: memref<144x512xbf16, #tpu.memory_space<vmem>>, %arg4: memref<1x512xf32, #tpu.memory_space<vmem>>, %arg5: memref<512x128xbf16, #tpu.memory_space<vmem>>, %arg6: memref<1x128xf32, #tpu.memory_space<vmem>>, %arg7: memref<8x128xf32, #tpu.memory_space<vmem>>) attributes {dimension_semantics = [#tpu.dimension_semantics<parallel>], iteration_bounds = array<i64: 1>, scalar_prefetch = 0 : i64, scratch_operands = 0 : i64, tpu.core_type = #tpu.core_type<tc>, window_params = [{transform_indices = @transform_0, window_bounds = array<i64: 8, 3>}, {pipeline_mode = #tpu.pipeline_mode<synchronous>, transform_indices = @transform_1, window_bounds = array<i64: 32, 48>}, {pipeline_mode = #tpu.pipeline_mode<synchronous>, transform_indices = @transform_2, window_bounds = array<i64: 144, 512>}, {pipeline_mode = #tpu.pipeline_mode<synchronous>, transform_indices = @transform_3, window_bounds = array<i64: 1, 512>}, {pipeline_mode = #tpu.pipeline_mode<synchronous>, transform_indices = @transform_4, window_bounds = array<i64: 512, 128>}, {pipeline_mode = #tpu.pipeline_mode<synchronous>, transform_indices = @transform_5, window_bounds = array<i64: 1, 128>}, {transform_indices = @transform_6, window_bounds = array<i64: 8, 128>}]} {
    %0 = tpu.iota {dimensions = array<i32: 1>} : vector<8x32xi32>
    %cst = arith.constant 0.000000e+00 : f32
    %1 = vector.broadcast %cst : f32 to vector<8x512xf32>
    %c0 = arith.constant 0 : index
    %c0_0 = arith.constant 0 : index
    %2 = vector.load %arg1[%c0, %c0_0] : memref<8x3xi32, #tpu.memory_space<vmem>>, vector<8x1xi32>
    %3 = vector.broadcast %2 : vector<8x1xi32> to vector<8x32xi32>
    %4 = arith.cmpi eq, %0, %3 : vector<8x32xi32>
    %5 = arith.extui %4 : vector<8x32xi1> to vector<8x32xi32>
    %6 = arith.sitofp %5 : vector<8x32xi32> to vector<8x32xf32>
    %c0_1 = arith.constant 0 : index
    %c0_2 = arith.constant 0 : index
    %7 = vector.load %arg2[%c0_1, %c0_2] : memref<32x48xf32, #tpu.memory_space<vmem>>, vector<32x48xf32>
    %cst_3 = arith.constant dense<0.000000e+00> : vector<8x48xf32>
    %8 = tpu.matmul %6, %7, %cst_3 {dimension_numbers = #tpu.dot_dimension_numbers<[1], [0], [0], [1], [0, 0, 1, 1], [], []>} : vector<8x32xf32>, vector<32x48xf32>, vector<8x48xf32> -> vector<8x48xf32>
    %c0_4 = arith.constant 0 : index
    %c0_5 = arith.constant 0 : index
    %9 = vector.load %arg3[%c0_4, %c0_5] : memref<144x512xbf16, #tpu.memory_space<vmem>>, vector<48x512xbf16>
    %10 = arith.truncf %8 : vector<8x48xf32> to vector<8x48xbf16>
    %cst_6 = arith.constant dense<0.000000e+00> : vector<8x512xf32>
    %11 = tpu.matmul %10, %9, %cst_6 {dimension_numbers = #tpu.dot_dimension_numbers<[1], [0], [0], [1], [0, 0, 1, 1], [], []>} : vector<8x48xbf16>, vector<48x512xbf16>, vector<8x512xf32> -> vector<8x512xf32>
    %12 = arith.addf %1, %11 : vector<8x512xf32>
    %c0_7 = arith.constant 0 : index
    %c1 = arith.constant 1 : index
    %13 = vector.load %arg1[%c0_7, %c1] : memref<8x3xi32, #tpu.memory_space<vmem>>, vector<8x1xi32>
    %14 = vector.broadcast %13 : vector<8x1xi32> to vector<8x32xi32>
    %15 = arith.cmpi eq, %0, %14 : vector<8x32xi32>
    %16 = arith.extui %15 : vector<8x32xi1> to vector<8x32xi32>
    %17 = arith.sitofp %16 : vector<8x32xi32> to vector<8x32xf32>
    %c0_8 = arith.constant 0 : index
    %c0_9 = arith.constant 0 : index
    %18 = vector.load %arg2[%c0_8, %c0_9] : memref<32x48xf32, #tpu.memory_space<vmem>>, vector<32x48xf32>
    %cst_10 = arith.constant dense<0.000000e+00> : vector<8x48xf32>
    %19 = tpu.matmul %17, %18, %cst_10 {dimension_numbers = #tpu.dot_dimension_numbers<[1], [0], [0], [1], [0, 0, 1, 1], [], []>} : vector<8x32xf32>, vector<32x48xf32>, vector<8x48xf32> -> vector<8x48xf32>
    %c48 = arith.constant 48 : index
    %c0_11 = arith.constant 0 : index
    %20 = vector.load %arg3[%c48, %c0_11] : memref<144x512xbf16, #tpu.memory_space<vmem>>, vector<48x512xbf16>
    %21 = arith.truncf %19 : vector<8x48xf32> to vector<8x48xbf16>
    %cst_12 = arith.constant dense<0.000000e+00> : vector<8x512xf32>
    %22 = tpu.matmul %21, %20, %cst_12 {dimension_numbers = #tpu.dot_dimension_numbers<[1], [0], [0], [1], [0, 0, 1, 1], [], []>} : vector<8x48xbf16>, vector<48x512xbf16>, vector<8x512xf32> -> vector<8x512xf32>
    %23 = arith.addf %12, %22 : vector<8x512xf32>
    %c0_13 = arith.constant 0 : index
    %c2 = arith.constant 2 : index
    %24 = vector.load %arg1[%c0_13, %c2] : memref<8x3xi32, #tpu.memory_space<vmem>>, vector<8x1xi32>
    %25 = vector.broadcast %24 : vector<8x1xi32> to vector<8x32xi32>
    %26 = arith.cmpi eq, %0, %25 : vector<8x32xi32>
    %27 = arith.extui %26 : vector<8x32xi1> to vector<8x32xi32>
    %28 = arith.sitofp %27 : vector<8x32xi32> to vector<8x32xf32>
    %c0_14 = arith.constant 0 : index
    %c0_15 = arith.constant 0 : index
    %29 = vector.load %arg2[%c0_14, %c0_15] : memref<32x48xf32, #tpu.memory_space<vmem>>, vector<32x48xf32>
    %cst_16 = arith.constant dense<0.000000e+00> : vector<8x48xf32>
    %30 = tpu.matmul %28, %29, %cst_16 {dimension_numbers = #tpu.dot_dimension_numbers<[1], [0], [0], [1], [0, 0, 1, 1], [], []>} : vector<8x32xf32>, vector<32x48xf32>, vector<8x48xf32> -> vector<8x48xf32>
    %c96 = arith.constant 96 : index
    %c0_17 = arith.constant 0 : index
    %31 = vector.load %arg3[%c96, %c0_17] : memref<144x512xbf16, #tpu.memory_space<vmem>>, vector<48x512xbf16>
    %32 = arith.truncf %30 : vector<8x48xf32> to vector<8x48xbf16>
    %cst_18 = arith.constant dense<0.000000e+00> : vector<8x512xf32>
    %33 = tpu.matmul %32, %31, %cst_18 {dimension_numbers = #tpu.dot_dimension_numbers<[1], [0], [0], [1], [0, 0, 1, 1], [], []>} : vector<8x48xbf16>, vector<48x512xbf16>, vector<8x512xf32> -> vector<8x512xf32>
    %34 = arith.addf %23, %33 : vector<8x512xf32>
    %c0_19 = arith.constant 0 : index
    %c0_20 = arith.constant 0 : index
    %35 = vector.load %arg4[%c0_19, %c0_20] : memref<1x512xf32, #tpu.memory_space<vmem>>, vector<1x512xf32>
    %36 = vector.broadcast %35 : vector<1x512xf32> to vector<8x512xf32>
    %37 = arith.addf %34, %36 : vector<8x512xf32>
    %38 = math.tanh %37 : vector<8x512xf32>
    %39 = arith.truncf %38 : vector<8x512xf32> to vector<8x512xbf16>
    %c0_21 = arith.constant 0 : index
    %c0_22 = arith.constant 0 : index
    %40 = vector.load %arg5[%c0_21, %c0_22] : memref<512x128xbf16, #tpu.memory_space<vmem>>, vector<512x128xbf16>
    %cst_23 = arith.constant dense<0.000000e+00> : vector<8x128xf32>
    %41 = tpu.matmul %39, %40, %cst_23 {dimension_numbers = #tpu.dot_dimension_numbers<[1], [0], [0], [1], [0, 0, 1, 1], [], []>} : vector<8x512xbf16>, vector<512x128xbf16>, vector<8x128xf32> -> vector<8x128xf32>
    %c0_24 = arith.constant 0 : index
    %c0_25 = arith.constant 0 : index
    %42 = vector.load %arg6[%c0_24, %c0_25] : memref<1x128xf32, #tpu.memory_space<vmem>>, vector<1x128xf32>
    %43 = vector.broadcast %42 : vector<1x128xf32> to vector<8x128xf32>
    %44 = arith.addf %41, %43 : vector<8x128xf32>
    %c0_26 = arith.constant 0 : index
    %c0_27 = arith.constant 0 : index
    %45 = vector.load %arg7[%c0_26, %c0_27] : memref<8x128xf32, #tpu.memory_space<vmem>>, vector<8x128xf32>
    tpu.vector_store %arg7[%c0_26, %c0_27], %44 {strides = array<i32>} : memref<8x128xf32, #tpu.memory_space<vmem>>, vector<8x128xf32>,
    return
  }
  func.func @transform_0(%arg0: i32) -> (i32, i32) {
    %c0_i32 = arith.constant 0 : i32
    %c0_i32_0 = arith.constant 0 : i32
    return %arg0, %c0_i32 : i32, i32
  }
  func.func @transform_1(%arg0: i32) -> (i32, i32) {
    %c0_i32 = arith.constant 0 : i32
    %c0_i32_0 = arith.constant 0 : i32
    %c0_i32_1 = arith.constant 0 : i32
    return %c0_i32, %c0_i32_0 : i32, i32
  }
  func.func @transform_2(%arg0: i32) -> (i32, i32) {
    %c0_i32 = arith.constant 0 : i32
    %c0_i32_0 = arith.constant 0 : i32
    %c0_i32_1 = arith.constant 0 : i32
    return %c0_i32, %c0_i32_0 : i32, i32
  }
  func.func @transform_3(%arg0: i32) -> (i32, i32) {
    %c0_i32 = arith.constant 0 : i32
    %c0_i32_0 = arith.constant 0 : i32
    %c0_i32_1 = arith.constant 0 : i32
    return %c0_i32, %c0_i32_0 : i32, i32
  }
  func.func @transform_4(%arg0: i32) -> (i32, i32) {
    %c0_i32 = arith.constant 0 : i32
    %c0_i32_0 = arith.constant 0 : i32
    %c0_i32_1 = arith.constant 0 : i32
    return %c0_i32, %c0_i32_0 : i32, i32
  }
  func.func @transform_5(%arg0: i32) -> (i32, i32) {
    %c0_i32 = arith.constant 0 : i32
    %c0_i32_0 = arith.constant 0 : i32
    %c0_i32_1 = arith.constant 0 : i32
    return %c0_i32, %c0_i32_0 : i32, i32
  }
  func.func @transform_6(%arg0: i32) -> (i32, i32) {
    %c0_i32 = arith.constant 0 : i32
    %c0_i32_0 = arith.constant 0 : i32
    return %arg0, %c0_i32 : i32, i32
  }
}

</mosaic_0001>

<llo_original>
// kernel: tpu_custom_call.1
$region0: #{tpu_custom_call.1}
  #allocation0 [shape = 'u32[]', space=smem, size = 0x4, offset = 0x4, fixed_abs, tag = 'smem constant byte address 0x4 - core index']
  #allocation1 [shape = 'u32[144,128]{1,0:T(1,128)}', space=vmem, size = 0x12000, scoped, tag = 'internal scratch']
  %s0 = inlined_call_operand.vmem [shape: s32[8,3], index: 0, kind: input, shape index: {}]
  %s1 = inlined_call_operand.hbm [shape: f32[32,48], index: 1, kind: input, shape index: {}]
  %s2 = inlined_call_operand.hbm [shape: bf16[144,512], index: 2, kind: input, shape index: {}]
  %s3 = inlined_call_operand.vmem [shape: f32[1,512], index: 3, kind: input, shape index: {}]
  %s4 = inlined_call_operand.hbm [shape: bf16[512,128], index: 4, kind: input, shape index: {}]
  %s5 = inlined_call_operand.vmem [shape: f32[1,128], index: 5, kind: input, shape index: {}]
  %s6 = inlined_call_operand.hbm [shape: f32[8,128], index: 6, kind: output, shape index: {}]
  %s7 = sld [smem:[#allocation0]]
  $region46: #{tpu_custom_call.1} parent=0
    _
  %s9 = ssub.s32 1, %s7
  %s10 = scalar_select 0, %s9, %s7
  $region1: #{tpu_custom_call.1} parent=0
    #allocation2 [shape = 'u8[16384]{0}', space=vmem, size = 0x4000, scoped, tag = 'input window, operand 1, single buffered']
    #allocation3 [shape = 's32[1]{0}', space=sflag, size = 0x4, scoped, tag = 'scoped memory for tpu_custom_call.1']
    #allocation4 [shape = 's32[1]{0}', space=sflag, size = 0x4, scoped, tag = 'scoped memory for tpu_custom_call.1']
    #allocation5 [shape = 'u8[147456]{0}', space=vmem, size = 0x24000, scoped, tag = 'input window, operand 2, single buffered']
    #allocation6 [shape = 's32[1]{0}', space=sflag, size = 0x4, scoped, tag = 'scoped memory for tpu_custom_call.1']
    #allocation7 [shape = 'u8[131072]{0}', space=vmem, size = 0x20000, scoped, tag = 'input window, operand 4, single buffered']
    #allocation8 [shape = 'u8[4096]{0}', space=vmem, size = 0x1000, scoped, tag = 'output window, operand 0, single buffered']
    %11 = vsyncpa [#allocation3], 0
    %12 = vsyncpa [#allocation6], 0
    %13 = vsyncpa [#allocation4], 0
    // Predicated region
    $region2: #{tpu_custom_call.1} parent=1 // pred_check
      _
    $region3: #{tpu_custom_call.1} parent=1 // pred_check_branch
      %15 = sbr.rel (0) target = $region5
    $region4: #{tpu_custom_call.1} parent=1 // pred_region
      _
    $region5: #{tpu_custom_call.1} parent=1 // pred_fallthru
      _
    // Predicated region
    $region6: #{tpu_custom_call.1} parent=1 // pred_check
      _
    $region7: #{tpu_custom_call.1} parent=1 // pred_check_branch
      %17 = sbr.rel (0) target = $region9
    $region8: #{tpu_custom_call.1} parent=1 // pred_region
      %s19 = ssub.s32 512, 512
      %20 = vsyncadd [#allocation3], %s19
      %s21 = sshll.u32 [#allocation2], 4
      %s22 = int_to_ptr.vmem [resolvable:$true] %s21
      %27 = dma.hbm_to_vmem [thread:$0]  %s1, 512, %s22, [#allocation3], 128, 128, 8
    $region9: #{tpu_custom_call.1} parent=1 // pred_fallthru
      _
    // Predicated region
    $region10: #{tpu_custom_call.1} parent=1 // pred_check
      _
    $region11: #{tpu_custom_call.1} parent=1 // pred_check_branch
      %29 = sbr.rel (0) target = $region13
    $region12: #{tpu_custom_call.1} parent=1 // pred_region
      %s31 = ssub.s32 4608, 4608
      %32 = vsyncadd [#allocation6], %s31
      %s33 = sshll.u32 [#allocation5], 4
      %s34 = int_to_ptr.vmem [resolvable:$true] %s33
      %39 = dma.hbm_to_vmem [thread:$0]  %s2, 4608, %s34, [#allocation6], 256, 256, 16
    $region13: #{tpu_custom_call.1} parent=1 // pred_fallthru
      _
    // Predicated region
    $region14: #{tpu_custom_call.1} parent=1 // pred_check
      _
    $region15: #{tpu_custom_call.1} parent=1 // pred_check_branch
      %41 = sbr.rel (0) target = $region17
    $region16: #{tpu_custom_call.1} parent=1 // pred_region
      _
    $region17: #{tpu_custom_call.1} parent=1 // pred_fallthru
      _
    // Predicated region
    $region18: #{tpu_custom_call.1} parent=1 // pred_check
      _
    $region19: #{tpu_custom_call.1} parent=1 // pred_check_branch
      %43 = sbr.rel (0) target = $region21
    $region20: #{tpu_custom_call.1} parent=1 // pred_region
      %s45 = ssub.s32 4096, 4096
      %46 = vsyncadd [#allocation6], %s45
      %s47 = sshll.u32 [#allocation7], 4
      %s48 = int_to_ptr.vmem [resolvable:$true] %s47
      %53 = dma.hbm_to_vmem [thread:$0]  %s4, 4096, %s48, [#allocation6], 64, 64, 4
    $region21: #{tpu_custom_call.1} parent=1 // pred_fallthru
      _
    // Predicated region
    $region22: #{tpu_custom_call.1} parent=1 // pred_check
      _
    $region23: #{tpu_custom_call.1} parent=1 // pred_check_branch
      %55 = sbr.rel (0) target = $region25
    $region24: #{tpu_custom_call.1} parent=1 // pred_region
      _
    $region25: #{tpu_custom_call.1} parent=1 // pred_fallthru
      _
    // Predicated region
    $region26: #{tpu_custom_call.1} parent=1 // pred_check
      _
    $region27: #{tpu_custom_call.1} parent=1 // pred_check_branch
      %57 = sbr.rel (0) target = $region29
    $region28: #{tpu_custom_call.1} parent=1 // pred_region
      %58 = dma.done [#allocation3], 512
    $region29: #{tpu_custom_call.1} parent=1 // pred_fallthru
      _
    // Predicated region
    $region30: #{tpu_custom_call.1} parent=1 // pred_check
      _
    $region31: #{tpu_custom_call.1} parent=1 // pred_check_branch
      %60 = sbr.rel (0) target = $region33
    $region32: #{tpu_custom_call.1} parent=1 // pred_region
      %61 = dma.done [#allocation6], 4608
    $region33: #{tpu_custom_call.1} parent=1 // pred_fallthru
      _
    // Predicated region
    $region34: #{tpu_custom_call.1} parent=1 // pred_check
      _
    $region35: #{tpu_custom_call.1} parent=1 // pred_check_branch
      %63 = sbr.rel (0) target = $region37
    $region36: #{tpu_custom_call.1} parent=1 // pred_region
      %64 = dma.done [#allocation6], 4096
    $region37: #{tpu_custom_call.1} parent=1 // pred_fallthru
      _
    %v66 = vlaneseq
    %v67 = vand.u32 %v66, 127
    %v68 = vld [vmem:[%s0] sm:$0xff]
    %69 = vset.pattern.permute.xlu0 0
    %70 = vperm.xlu0 %69, %v68
    %v71 = vpop.permute.xlu0 %70
    %vm72 = vcmp.eq.s32.totalorder %v67, %v71
    %v73 = vsel %vm72, 1, 0
    %v74 = vcvt.s32.f32 %v73
    %v75 = vld [vmem:[#allocation2] sm:$0xff]
    %v76 = vld [vmem:[#allocation2 + $0x8] sm:$0xff]
    %v77 = vld [vmem:[#allocation2 + $0x10] sm:$0xff]
    %v78 = vld [vmem:[#allocation2 + $0x18] sm:$0xff]
    %vm79 = vcmask 261120
    %v81 = vsel %vm79, %v74, 0
    %83 = vmatprep.subr.mxu0 0.0
    %84 = vmatpush1.msra.mxu0 0.0
    %85 = vmatprep.subr.mxu0 0.0
    %86 = vmatpush1.msra.mxu0 0.0
    %87 = vmatprep.subr.mxu0 0.0
    %88 = vmatpush1.msra.mxu0 0.0
    %89 = vmatprep.subr.mxu0 0.0
    %90 = vmatpush1.msra.mxu0 0.0
    %91 = vmatprep.subr.mxu0 0.0
    %92 = vmatpush1.msra.mxu0 0.0
    %93 = vmatprep.subr.mxu0 0.0
    %94 = vmatpush1.msra.mxu0 0.0
    %95 = vmatprep.subr.mxu0 0.0
    %96 = vmatpush1.msra.mxu0 0.0
    %97 = vmatprep.subr.mxu0 0.0
    %98 = vmatpush1.msra.mxu0 0.0
    %99 = vmatprep.subr.mxu0 0.0
    %100 = vmatpush1.msra.mxu0 0.0
    %101 = vmatprep.subr.mxu0 0.0
    %102 = vmatpush1.msra.mxu0 0.0
    %103 = vmatprep.subr.mxu0 0.0
    %104 = vmatpush1.msra.mxu0 0.0
    %105 = vmatprep.subr.mxu0 0.0
    %106 = vmatpush1.msra.mxu0 0.0
    %107 = vmatprep.subr.mxu0 0.0
    %108 = vmatpush1.msra.mxu0 %v78
    %109 = vmatprep.subr.mxu0 0.0
    %110 = vmatpush1.msra.mxu0 %v77
    %111 = vmatprep.subr.mxu0 0.0
    %112 = vmatpush1.msra.mxu0 %v76
    %113 = vmatprep.subr.mxu0 0.0
    %114 = vmatpush1.msra.mxu0 %v75
    %115 = vmatprep.subr.mxu0 0.0
    %116 = vmatpush2.msra.mxu0 0.0
    %117 = vmatprep.subr.mxu0 0.0
    %118 = vmatpush2.msra.mxu0 0.0
    %119 = vmatprep.subr.mxu0 0.0
    %120 = vmatpush2.msra.mxu0 0.0
    %121 = vmatprep.subr.mxu0 0.0
    %122 = vmatpush2.msra.mxu0 0.0
    %123 = vmatprep.subr.mxu0 0.0
    %124 = vmatpush2.msra.mxu0 0.0
    %125 = vmatprep.subr.mxu0 0.0
    %126 = vmatpush2.msra.mxu0 0.0
    %127 = vmatprep.subr.mxu0 0.0
    %128 = vmatpush2.msra.mxu0 0.0
    %129 = vmatprep.subr.mxu0 0.0
    %130 = vmatpush2.msra.mxu0 0.0
    %131 = vmatprep.subr.mxu0 0.0
    %132 = vmatpush2.msra.mxu0 0.0
    %133 = vmatprep.subr.mxu0 0.0
    %134 = vmatpush2.msra.mxu0 0.0
    %135 = vmatprep.subr.mxu0 0.0
    %136 = vmatpush2.msra.mxu0 0.0
    %137 = vmatprep.subr.mxu0 0.0
    %138 = vmatpush2.msra.mxu0 0.0
    %139 = vmatprep.subr.mxu0 0.0
    %140 = vmatpush2.msra.mxu0 0.0
    %141 = vmatprep.subr.mxu0 0.0
    %142 = vmatpush2.msra.mxu0 0.0
    %143 = vmatprep.subr.mxu0 0.0
    %144 = vmatpush2.msra.mxu0 0.0
    %145 = vmatprep.subr.mxu0 0.0
    %146 = vmatpush2.msra.mxu0 0.0
    %147 = vmatprep.mubr.f32.mxu0 0.0
    %148 = vmatmul.mubr.f32.gmra.mxu0 %v81
    %v149 = vpop.f32.mrf.mxu0
    %v150 = vadd.f32 0.0, %v149
    %v151 = vpop.f32.mrf.mxu0
    %152 = vdwg.mxu0
    %v153 = vld [vmem:[#allocation5] sm:$0xff]
    %v154 = vld [vmem:[#allocation5 + $0x8] sm:$0xff]
    %v155 = vld [vmem:[#allocation5 + $0x10] sm:$0xff]
    %v156 = vld [vmem:[#allocation5 + $0x18] sm:$0xff]
    %v157 = vld [vmem:[#allocation5 + $0x20] sm:$0xff]
    %v158 = vld [vmem:[#allocation5 + $0x28] sm:$0xff]
    %v159 = vld [vmem:[#allocation5 + $0x30] sm:$0xff]
    %v160 = vld [vmem:[#allocation5 + $0x38] sm:$0xff]
    %v161 = vld [vmem:[#allocation5 + $0x40] sm:$0xff]
    %v162 = vld [vmem:[#allocation5 + $0x48] sm:$0xff]
    %v163 = vld [vmem:[#allocation5 + $0x50] sm:$0xff]
    %v164 = vld [vmem:[#allocation5 + $0x58] sm:$0xff]
    %v165 = vpack.c.bf16 %v150, %v150
    %166 = vset.pattern.permute.xlu0 1
    %167 = vperm.xlu0 %166, %v68
    %v168 = vpop.permute.xlu0 %167
    %vm169 = vcmp.eq.s32.totalorder %v67, %v168
    %v170 = vsel %vm169, 1, 0
    %v171 = vcvt.s32.f32 %v170
    %v173 = vsel %vm79, %v171, 0
    %175 = vmatprep.subr.mxu0 0.0
    %176 = vmatpush1.msra.mxu0 0.0
    %177 = vmatprep.subr.mxu0 0.0
    %178 = vmatpush1.msra.mxu0 0.0
    %179 = vmatprep.subr.mxu0 0.0
    %180 = vmatpush1.msra.mxu0 0.0
    %181 = vmatprep.subr.mxu0 0.0
    %182 = vmatpush1.msra.mxu0 0.0
    %183 = vmatprep.subr.mxu0 0.0
    %184 = vmatpush1.msra.mxu0 0.0
    %185 = vmatprep.subr.mxu0 0.0
    %186 = vmatpush1.msra.mxu0 0.0
    %187 = vmatprep.subr.mxu0 0.0
    %188 = vmatpush1.msra.mxu0 0.0
    %189 = vmatprep.subr.mxu0 0.0
    %190 = vmatpush1.msra.mxu0 0.0
    %191 = vmatprep.subr.mxu0 0.0
    %192 = vmatpush1.msra.mxu0 0.0
    %193 = vmatprep.subr.mxu0 0.0
    %194 = vmatpush1.msra.mxu0 0.0
    %195 = vmatprep.subr.mxu0 0.0
    %196 = vmatpush1.msra.mxu0 0.0
    %197 = vmatprep.subr.mxu0 0.0
    %198 = vmatpush1.msra.mxu0 0.0
    %199 = vmatprep.subr.mxu0 0.0
    %200 = vmatpush1.msra.mxu0 %v78
    %201 = vmatprep.subr.mxu0 0.0
    %202 = vmatpush1.msra.mxu0 %v77
    %203 = vmatprep.subr.mxu0 0.0
    %204 = vmatpush1.msra.mxu0 %v76
    %205 = vmatprep.subr.mxu0 0.0
    %206 = vmatpush1.msra.mxu0 %v75
    %207 = vmatprep.subr.mxu0 0.0
    %208 = vmatpush2.msra.mxu0 0.0
    %209 = vmatprep.subr.mxu0 0.0
    %210 = vmatpush2.msra.mxu0 0.0
    %211 = vmatprep.subr.mxu0 0.0
    %212 = vmatpush2.msra.mxu0 0.0
    %213 = vmatprep.subr.mxu0 0.0
    %214 = vmatpush2.msra.mxu0 0.0
    %215 = vmatprep.subr.mxu0 0.0
    %216 = vmatpush2.msra.mxu0 0.0
    %217 = vmatprep.subr.mxu0 0.0
    %218 = vmatpush2.msra.mxu0 0.0
    %219 = vmatprep.subr.mxu0 0.0
    %220 = vmatpush2.msra.mxu0 0.0
    %221 = vmatprep.subr.mxu0 0.0
    %222 = vmatpush2.msra.mxu0 0.0
    %223 = vmatprep.subr.mxu0 0.0
    %224 = vmatpush2.msra.mxu0 0.0
    %225 = vmatprep.subr.mxu0 0.0
    %226 = vmatpush2.msra.mxu0 0.0
    %227 = vmatprep.subr.mxu0 0.0
    %228 = vmatpush2.msra.mxu0 0.0
    %229 = vmatprep.subr.mxu0 0.0
    %230 = vmatpush2.msra.mxu0 0.0
    %231 = vmatprep.subr.mxu0 0.0
    %232 = vmatpush2.msra.mxu0 0.0
    %233 = vmatprep.subr.mxu0 0.0
    %234 = vmatpush2.msra.mxu0 0.0
    %235 = vmatprep.subr.mxu0 0.0
    %236 = vmatpush2.msra.mxu0 0.0
    %237 = vmatprep.subr.mxu0 0.0
    %238 = vmatpush2.msra.mxu0 0.0
    %239 = vmatprep.mubr.f32.mxu0 0.0
    %240 = vmatmul.mubr.f32.gmra.mxu0 %v173
    %v241 = vpop.f32.mrf.mxu0
    %v242 = vadd.f32 0.0, %v241
    %v243 = vpop.f32.mrf.mxu0
    %244 = vdwg.mxu0
    %v245 = vld [vmem:[#allocation5 + $0x60] sm:$0xff]
    %v246 = vld [vmem:[#allocation5 + $0x68] sm:$0xff]
    %v247 = vld [vmem:[#allocation5 + $0x70] sm:$0xff]
    %v248 = vld [vmem:[#allocation5 + $0x78] sm:$0xff]
    %v249 = vld [vmem:[#allocation5 + $0x80] sm:$0xff]
    %v250 = vld [vmem:[#allocation5 + $0x88] sm:$0xff]
    %v251 = vld [vmem:[#allocation5 + $0x90] sm:$0xff]
    %v252 = vld [vmem:[#allocation5 + $0x98] sm:$0xff]
    %v253 = vld [vmem:[#allocation5 + $0xa0] sm:$0xff]
    %v254 = vld [vmem:[#allocation5 + $0xa8] sm:$0xff]
    %v255 = vld [vmem:[#allocation5 + $0xb0] sm:$0xff]
    %v256 = vld [vmem:[#allocation5 + $0xb8] sm:$0xff]
    %v257 = vpack.c.bf16 %v242, %v242
    %v270 = vunpack.c.l.b16 %v245
    %v271 = vunpack.c.h.b16 %v245
    %v272 = vunpack.c.l.b16 %v246
    %v273 = vunpack.c.h.b16 %v246
    %v274 = vunpack.c.l.b16 %v247
    %v275 = vunpack.c.h.b16 %v247
    %v276 = vunpack.c.l.b16 %v248
    %v277 = vunpack.c.h.b16 %v248
    %v278 = vunpack.c.l.b16 %v249
    %v279 = vunpack.c.h.b16 %v249
    %v280 = vunpack.c.l.b16 %v250
    %v281 = vunpack.c.h.b16 %v250
    %v282 = vunpack.c.l.b16 %v251
    %v283 = vunpack.c.h.b16 %v251
    %v284 = vunpack.c.l.b16 %v252
    %v285 = vunpack.c.h.b16 %v252
    %v286 = vunpack.c.l.b16 %v253
    %v287 = vunpack.c.h.b16 %v253
    %v288 = vunpack.c.l.b16 %v254
    %v289 = vunpack.c.h.b16 %v254
    %v290 = vunpack.c.l.b16 %v255
    %v291 = vunpack.c.h.b16 %v255
    %v292 = vunpack.c.l.b16 %v256
    %v293 = vunpack.c.h.b16 %v256
    %v294 = vpack.c.b16 %v274, %v270
    %v295 = vpack.c.b16 %v275, %v271
    %v296 = vpack.c.b16 %v276, %v272
    %v297 = vpack.c.b16 %v277, %v273
    %v298 = vpack.c.b16 %v282, %v278
    %v299 = vpack.c.b16 %v283, %v279
    %v300 = vpack.c.b16 %v284, %v280
    %v301 = vpack.c.b16 %v285, %v281
    %v302 = vpack.c.b16 %v290, %v286
    %v303 = vpack.c.b16 %v291, %v287
    %v304 = vpack.c.b16 %v292, %v288
    %v305 = vpack.c.b16 %v293, %v289
    %vm318 = vcmask 392192
    %v320 = vsel %vm318, %v257, 0
    %322 = vmatprep.subr.bf16.mxu0 0
    %323 = vmatpush1.bf16.msra.mxu0 0
    %324 = vmatprep.subr.bf16.mxu0 0
    %325 = vmatpush1.bf16.msra.mxu0 0
    %326 = vmatprep.subr.bf16.mxu0 0
    %327 = vmatpush1.bf16.msra.mxu0 0
    %328 = vmatprep.subr.bf16.mxu0 0
    %329 = vmatpush1.bf16.msra.mxu0 0
    %330 = vmatprep.subr.bf16.mxu0 0
    %331 = vmatpush1.bf16.msra.mxu0 0
    %332 = vmatprep.subr.bf16.mxu0 %v303
    %333 = vmatpush1.bf16.msra.mxu0 %v302
    %334 = vmatprep.subr.bf16.mxu0 %v299
    %335 = vmatpush1.bf16.msra.mxu0 %v298
    %336 = vmatprep.subr.bf16.mxu0 %v295
    %337 = vmatpush1.bf16.msra.mxu0 %v294
    %338 = vmatprep.subr.bf16.mxu0 0
    %339 = vmatpush2.bf16.msra.mxu0 0
    %340 = vmatprep.subr.bf16.mxu0 0
    %341 = vmatpush2.bf16.msra.mxu0 0
    %342 = vmatprep.subr.bf16.mxu0 0
    %343 = vmatpush2.bf16.msra.mxu0 0
    %344 = vmatprep.subr.bf16.mxu0 0
    %345 = vmatpush2.bf16.msra.mxu0 0
    %346 = vmatprep.subr.bf16.mxu0 0
    %347 = vmatpush2.bf16.msra.mxu0 0
    %348 = vmatprep.subr.bf16.mxu0 0
    %349 = vmatpush2.bf16.msra.mxu0 0
    %350 = vmatprep.subr.bf16.mxu0 0
    %351 = vmatpush2.bf16.msra.mxu0 0
    %352 = vmatprep.subr.bf16.mxu0 0
    %353 = vmatpush2.bf16.msra.mxu0 0
    %354 = vmatprep.mubr.bf16.mxu0 0
    %355 = vmatmul.mubr.bf16.gmra.mxu0 %v320
    %v356 = vpop.f32.mrf.mxu0
    %v357 = vadd.f32 0.0, %v356
    %v358 = vpop.f32.mrf.mxu0
    %v359 = vadd.f32 0.0, %v358
    %v360 = vpop.f32.mrf.mxu0
    %v361 = vpop.f32.mrf.mxu0
    %362 = vdwg.mxu0
    %363 = vmatprep.subr.bf16.mxu0 0
    %364 = vmatpush1.bf16.msra.mxu0 0
    %365 = vmatprep.subr.bf16.mxu0 0
    %366 = vmatpush1.bf16.msra.mxu0 0
    %367 = vmatprep.subr.bf16.mxu0 0
    %368 = vmatpush1.bf16.msra.mxu0 0
    %369 = vmatprep.subr.bf16.mxu0 0
    %370 = vmatpush1.bf16.msra.mxu0 0
    %371 = vmatprep.subr.bf16.mxu0 0
    %372 = vmatpush1.bf16.msra.mxu0 0
    %373 = vmatprep.subr.bf16.mxu0 %v305
    %374 = vmatpush1.bf16.msra.mxu0 %v304
    %375 = vmatprep.subr.bf16.mxu0 %v301
    %376 = vmatpush1.bf16.msra.mxu0 %v300
    %377 = vmatprep.subr.bf16.mxu0 %v297
    %378 = vmatpush1.bf16.msra.mxu0 %v296
    %379 = vmatprep.subr.bf16.mxu0 0
    %380 = vmatpush2.bf16.msra.mxu0 0
    %381 = vmatprep.subr.bf16.mxu0 0
    %382 = vmatpush2.bf16.msra.mxu0 0
    %383 = vmatprep.subr.bf16.mxu0 0
    %384 = vmatpush2.bf16.msra.mxu0 0
    %385 = vmatprep.subr.bf16.mxu0 0
    %386 = vmatpush2.bf16.msra.mxu0 0
    %387 = vmatprep.subr.bf16.mxu0 0
    %388 = vmatpush2.bf16.msra.mxu0 0
    %389 = vmatprep.subr.bf16.mxu0 0
    %390 = vmatpush2.bf16.msra.mxu0 0
    %391 = vmatprep.subr.bf16.mxu0 0
    %392 = vmatpush2.bf16.msra.mxu0 0
    %393 = vmatprep.subr.bf16.mxu0 0
    %394 = vmatpush2.bf16.msra.mxu0 0
    %395 = vmatprep.mubr.bf16.mxu0 0
    %396 = vmatmul.mubr.bf16.gmra.mxu0 %v320
    %v397 = vpop.f32.mrf.mxu0
    %v398 = vadd.f32 0.0, %v397
    %v399 = vpop.f32.mrf.mxu0
    %v400 = vadd.f32 0.0, %v399
    %v401 = vpop.f32.mrf.mxu0
    %v402 = vpop.f32.mrf.mxu0
    %403 = vdwg.mxu0
    %v416 = vunpack.c.l.b16 %v153
    %v417 = vunpack.c.h.b16 %v153
    %v418 = vunpack.c.l.b16 %v154
    %v419 = vunpack.c.h.b16 %v154
    %v420 = vunpack.c.l.b16 %v155
    %v421 = vunpack.c.h.b16 %v155
    %v422 = vunpack.c.l.b16 %v156
    %v423 = vunpack.c.h.b16 %v156
    %v424 = vunpack.c.l.b16 %v157
    %v425 = vunpack.c.h.b16 %v157
    %v426 = vunpack.c.l.b16 %v158
    %v427 = vunpack.c.h.b16 %v158
    %v428 = vunpack.c.l.b16 %v159
    %v429 = vunpack.c.h.b16 %v159
    %v430 = vunpack.c.l.b16 %v160
    %v431 = vunpack.c.h.b16 %v160
    %v432 = vunpack.c.l.b16 %v161
    %v433 = vunpack.c.h.b16 %v161
    %v434 = vunpack.c.l.b16 %v162
    %v435 = vunpack.c.h.b16 %v162
    %v436 = vunpack.c.l.b16 %v163
    %v437 = vunpack.c.h.b16 %v163
    %v438 = vunpack.c.l.b16 %v164
    %v439 = vunpack.c.h.b16 %v164
    %v440 = vpack.c.b16 %v420, %v416
    %v441 = vpack.c.b16 %v421, %v417
    %v442 = vpack.c.b16 %v422, %v418
    %v443 = vpack.c.b16 %v423, %v419
    %v444 = vpack.c.b16 %v428, %v424
    %v445 = vpack.c.b16 %v429, %v425
    %v446 = vpack.c.b16 %v430, %v426
    %v447 = vpack.c.b16 %v431, %v427
    %v448 = vpack.c.b16 %v436, %v432
    %v449 = vpack.c.b16 %v437, %v433
    %v450 = vpack.c.b16 %v438, %v434
    %v451 = vpack.c.b16 %v439, %v435
    %v465 = vsel %vm318, %v165, 0
    %467 = vmatprep.subr.bf16.mxu0 0
    %468 = vmatpush1.bf16.msra.mxu0 0
    %469 = vmatprep.subr.bf16.mxu0 0
    %470 = vmatpush1.bf16.msra.mxu0 0
    %471 = vmatprep.subr.bf16.mxu0 0
    %472 = vmatpush1.bf16.msra.mxu0 0
    %473 = vmatprep.subr.bf16.mxu0 0
    %474 = vmatpush1.bf16.msra.mxu0 0
    %475 = vmatprep.subr.bf16.mxu0 0
    %476 = vmatpush1.bf16.msra.mxu0 0
    %477 = vmatprep.subr.bf16.mxu0 %v449
    %478 = vmatpush1.bf16.msra.mxu0 %v448
    %479 = vmatprep.subr.bf16.mxu0 %v445
    %480 = vmatpush1.bf16.msra.mxu0 %v444
    %481 = vmatprep.subr.bf16.mxu0 %v441
    %482 = vmatpush1.bf16.msra.mxu0 %v440
    %483 = vmatprep.subr.bf16.mxu0 0
    %484 = vmatpush2.bf16.msra.mxu0 0
    %485 = vmatprep.subr.bf16.mxu0 0
    %486 = vmatpush2.bf16.msra.mxu0 0
    %487 = vmatprep.subr.bf16.mxu0 0
    %488 = vmatpush2.bf16.msra.mxu0 0
    %489 = vmatprep.subr.bf16.mxu0 0
    %490 = vmatpush2.bf16.msra.mxu0 0
    %491 = vmatprep.subr.bf16.mxu0 0
    %492 = vmatpush2.bf16.msra.mxu0 0
    %493 = vmatprep.subr.bf16.mxu0 0
    %494 = vmatpush2.bf16.msra.mxu0 0
    %495 = vmatprep.subr.bf16.mxu0 0
    %496 = vmatpush2.bf16.msra.mxu0 0
    %497 = vmatprep.subr.bf16.mxu0 0
    %498 = vmatpush2.bf16.msra.mxu0 0
    %499 = vmatprep.mubr.bf16.mxu0 0
    %500 = vmatmul.mubr.bf16.gmra.mxu0 %v465
    %v501 = vpop.f32.mrf.mxu0
    %v502 = vadd.f32 %v357, %v501
    %v503 = vpop.f32.mrf.mxu0
    %v504 = vadd.f32 %v359, %v503
    %v505 = vpop.f32.mrf.mxu0
    %v506 = vpop.f32.mrf.mxu0
    %507 = vdwg.mxu0
    %508 = vmatprep.subr.bf16.mxu0 0
    %509 = vmatpush1.bf16.msra.mxu0 0
    %510 = vmatprep.subr.bf16.mxu0 0
    %511 = vmatpush1.bf16.msra.mxu0 0
    %512 = vmatprep.subr.bf16.mxu0 0
    %513 = vmatpush1.bf16.msra.mxu0 0
    %514 = vmatprep.subr.bf16.mxu0 0
    %515 = vmatpush1.bf16.msra.mxu0 0
    %516 = vmatprep.subr.bf16.mxu0 0
    %517 = vmatpush1.bf16.msra.mxu0 0
    %518 = vmatprep.subr.bf16.mxu0 %v451
    %519 = vmatpush1.bf16.msra.mxu0 %v450
    %520 = vmatprep.subr.bf16.mxu0 %v447
    %521 = vmatpush1.bf16.msra.mxu0 %v446
    %522 = vmatprep.subr.bf16.mxu0 %v443
    %523 = vmatpush1.bf16.msra.mxu0 %v442
    %524 = vmatprep.subr.bf16.mxu0 0
    %525 = vmatpush2.bf16.msra.mxu0 0
    %526 = vmatprep.subr.bf16.mxu0 0
    %527 = vmatpush2.bf16.msra.mxu0 0
    %528 = vmatprep.subr.bf16.mxu0 0
    %529 = vmatpush2.bf16.msra.mxu0 0
    %530 = vmatprep.subr.bf16.mxu0 0
    %531 = vmatpush2.bf16.msra.mxu0 0
    %532 = vmatprep.subr.bf16.mxu0 0
    %533 = vmatpush2.bf16.msra.mxu0 0
    %534 = vmatprep.subr.bf16.mxu0 0
    %535 = vmatpush2.bf16.msra.mxu0 0
    %536 = vmatprep.subr.bf16.mxu0 0
    %537 = vmatpush2.bf16.msra.mxu0 0
    %538 = vmatprep.subr.bf16.mxu0 0
    %539 = vmatpush2.bf16.msra.mxu0 0
    %540 = vmatprep.mubr.bf16.mxu0 0
    %541 = vmatmul.mubr.bf16.gmra.mxu0 %v465
    %v542 = vpop.f32.mrf.mxu0
    %v543 = vadd.f32 %v398, %v542
    %v544 = vpop.f32.mrf.mxu0
    %v545 = vadd.f32 %v400, %v544
    %v546 = vpop.f32.mrf.mxu0
    %v547 = vpop.f32.mrf.mxu0
    %548 = vdwg.mxu0
    %549 = vset.pattern.permute.xlu0 2
    %550 = vperm.xlu0 %549, %v68
    %v551 = vpop.permute.xlu0 %550
    %vm552 = vcmp.eq.s32.totalorder %v67, %v551
    %v553 = vsel %vm552, 1, 0
    %v554 = vcvt.s32.f32 %v553
    %v556 = vsel %vm79, %v554, 0
    %558 = vmatprep.subr.mxu0 0.0
    %559 = vmatpush1.msra.mxu0 0.0
    %560 = vmatprep.subr.mxu0 0.0
    %561 = vmatpush1.msra.mxu0 0.0
    %562 = vmatprep.subr.mxu0 0.0
    %563 = vmatpush1.msra.mxu0 0.0
    %564 = vmatprep.subr.mxu0 0.0
    %565 = vmatpush1.msra.mxu0 0.0
    %566 = vmatprep.subr.mxu0 0.0
    %567 = vmatpush1.msra.mxu0 0.0
    %568 = vmatprep.subr.mxu0 0.0
    %569 = vmatpush1.msra.mxu0 0.0
    %570 = vmatprep.subr.mxu0 0.0
    %571 = vmatpush1.msra.mxu0 0.0
    %572 = vmatprep.subr.mxu0 0.0
    %573 = vmatpush1.msra.mxu0 0.0
    %574 = vmatprep.subr.mxu0 0.0
    %575 = vmatpush1.msra.mxu0 0.0
    %576 = vmatprep.subr.mxu0 0.0
    %577 = vmatpush1.msra.mxu0 0.0
    %578 = vmatprep.subr.mxu0 0.0
    %579 = vmatpush1.msra.mxu0 0.0
    %580 = vmatprep.subr.mxu0 0.0
    %581 = vmatpush1.msra.mxu0 0.0
    %582 = vmatprep.subr.mxu0 0.0
    %583 = vmatpush1.msra.mxu0 %v78
    %584 = vmatprep.subr.mxu0 0.0
    %585 = vmatpush1.msra.mxu0 %v77
    %586 = vmatprep.subr.mxu0 0.0
    %587 = vmatpush1.msra.mxu0 %v76
    %588 = vmatprep.subr.mxu0 0.0
    %589 = vmatpush1.msra.mxu0 %v75
    %590 = vmatprep.subr.mxu0 0.0
    %591 = vmatpush2.msra.mxu0 0.0
    %592 = vmatprep.subr.mxu0 0.0
    %593 = vmatpush2.msra.mxu0 0.0
    %594 = vmatprep.subr.mxu0 0.0
    %595 = vmatpush2.msra.mxu0 0.0
    %596 = vmatprep.subr.mxu0 0.0
    %597 = vmatpush2.msra.mxu0 0.0
    %598 = vmatprep.subr.mxu0 0.0
    %599 = vmatpush2.msra.mxu0 0.0
    %600 = vmatprep.subr.mxu0 0.0
    %601 = vmatpush2.msra.mxu0 0.0
    %602 = vmatprep.subr.mxu0 0.0
    %603 = vmatpush2.msra.mxu0 0.0
    %604 = vmatprep.subr.mxu0 0.0
    %605 = vmatpush2.msra.mxu0 0.0
    %606 = vmatprep.subr.mxu0 0.0
    %607 = vmatpush2.msra.mxu0 0.0
    %608 = vmatprep.subr.mxu0 0.0
    %609 = vmatpush2.msra.mxu0 0.0
    %610 = vmatprep.subr.mxu0 0.0
    %611 = vmatpush2.msra.mxu0 0.0
    %612 = vmatprep.subr.mxu0 0.0
    %613 = vmatpush2.msra.mxu0 0.0
    %614 = vmatprep.subr.mxu0 0.0
    %615 = vmatpush2.msra.mxu0 0.0
    %616 = vmatprep.subr.mxu0 0.0
    %617 = vmatpush2.msra.mxu0 0.0
    %618 = vmatprep.subr.mxu0 0.0
    %619 = vmatpush2.msra.mxu0 0.0
    %620 = vmatprep.subr.mxu0 0.0
    %621 = vmatpush2.msra.mxu0 0.0
    %622 = vmatprep.mubr.f32.mxu0 0.0
    %623 = vmatmul.mubr.f32.gmra.mxu0 %v556
    %v624 = vpop.f32.mrf.mxu0
    %v625 = vadd.f32 0.0, %v624
    %v626 = vpop.f32.mrf.mxu0
    %627 = vdwg.mxu0
    %v628 = vld [vmem:[#allocation5 + $0xc0] sm:$0xff]
    %v629 = vld [vmem:[#allocation5 + $0xc8] sm:$0xff]
    %v630 = vld [vmem:[#allocation5 + $0xd0] sm:$0xff]
    %v631 = vld [vmem:[#allocation5 + $0xd8] sm:$0xff]
    %v632 = vld [vmem:[#allocation5 + $0xe0] sm:$0xff]
    %v633 = vld [vmem:[#allocation5 + $0xe8] sm:$0xff]
    %v634 = vld [vmem:[#allocation5 + $0xf0] sm:$0xff]
    %v635 = vld [vmem:[#allocation5 + $0xf8] sm:$0xff]
    %v636 = vld [vmem:[#allocation5 + $0x100] sm:$0xff]
    %v637 = vld [vmem:[#allocation5 + $0x108] sm:$0xff]
    %v638 = vld [vmem:[#allocation5 + $0x110] sm:$0xff]
    %v639 = vld [vmem:[#allocation5 + $0x118] sm:$0xff]
    %v640 = vpack.c.bf16 %v625, %v625
    %v653 = vunpack.c.l.b16 %v628
    %v654 = vunpack.c.h.b16 %v628
    %v655 = vunpack.c.l.b16 %v629
    %v656 = vunpack.c.h.b16 %v629
    %v657 = vunpack.c.l.b16 %v630
    %v658 = vunpack.c.h.b16 %v630
    %v659 = vunpack.c.l.b16 %v631
    %v660 = vunpack.c.h.b16 %v631
    %v661 = vunpack.c.l.b16 %v632
    %v662 = vunpack.c.h.b16 %v632
    %v663 = vunpack.c.l.b16 %v633
    %v664 = vunpack.c.h.b16 %v633
    %v665 = vunpack.c.l.b16 %v634
    %v666 = vunpack.c.h.b16 %v634
    %v667 = vunpack.c.l.b16 %v635
    %v668 = vunpack.c.h.b16 %v635
    %v669 = vunpack.c.l.b16 %v636
    %v670 = vunpack.c.h.b16 %v636
    %v671 = vunpack.c.l.b16 %v637
    %v672 = vunpack.c.h.b16 %v637
    %v673 = vunpack.c.l.b16 %v638
    %v674 = vunpack.c.h.b16 %v638
    %v675 = vunpack.c.l.b16 %v639
    %v676 = vunpack.c.h.b16 %v639
    %v677 = vpack.c.b16 %v657, %v653
    %v678 = vpack.c.b16 %v658, %v654
    %v679 = vpack.c.b16 %v659, %v655
    %v680 = vpack.c.b16 %v660, %v656
    %v681 = vpack.c.b16 %v665, %v661
    %v682 = vpack.c.b16 %v666, %v662
    %v683 = vpack.c.b16 %v667, %v663
    %v684 = vpack.c.b16 %v668, %v664
    %v685 = vpack.c.b16 %v673, %v669
    %v686 = vpack.c.b16 %v674, %v670
    %v687 = vpack.c.b16 %v675, %v671
    %v688 = vpack.c.b16 %v676, %v672
    %v702 = vsel %vm318, %v640, 0
    %704 = vmatprep.subr.bf16.mxu0 0
    %705 = vmatpush1.bf16.msra.mxu0 0
    %706 = vmatprep.subr.bf16.mxu0 0
    %707 = vmatpush1.bf16.msra.mxu0 0
    %708 = vmatprep.subr.bf16.mxu0 0
    %709 = vmatpush1.bf16.msra.mxu0 0
    %710 = vmatprep.subr.bf16.mxu0 0
    %711 = vmatpush1.bf16.msra.mxu0 0
    %712 = vmatprep.subr.bf16.mxu0 0
    %713 = vmatpush1.bf16.msra.mxu0 0
    %714 = vmatprep.subr.bf16.mxu0 %v686
    %715 = vmatpush1.bf16.msra.mxu0 %v685
    %716 = vmatprep.subr.bf16.mxu0 %v682
    %717 = vmatpush1.bf16.msra.mxu0 %v681
    %718 = vmatprep.subr.bf16.mxu0 %v678
    %719 = vmatpush1.bf16.msra.mxu0 %v677
    %720 = vmatprep.subr.bf16.mxu0 0
    %721 = vmatpush2.bf16.msra.mxu0 0
    %722 = vmatprep.subr.bf16.mxu0 0
    %723 = vmatpush2.bf16.msra.mxu0 0
    %724 = vmatprep.subr.bf16.mxu0 0
    %725 = vmatpush2.bf16.msra.mxu0 0
    %726 = vmatprep.subr.bf16.mxu0 0
    %727 = vmatpush2.bf16.msra.mxu0 0
    %728 = vmatprep.subr.bf16.mxu0 0
    %729 = vmatpush2.bf16.msra.mxu0 0
    %730 = vmatprep.subr.bf16.mxu0 0
    %731 = vmatpush2.bf16.msra.mxu0 0
    %732 = vmatprep.subr.bf16.mxu0 0
    %733 = vmatpush2.bf16.msra.mxu0 0
    %734 = vmatprep.subr.bf16.mxu0 0
    %735 = vmatpush2.bf16.msra.mxu0 0
    %736 = vmatprep.mubr.bf16.mxu0 0
    %737 = vmatmul.mubr.bf16.gmra.mxu0 %v702
    %v738 = vpop.f32.mrf.mxu0
    %v739 = vadd.f32 0.0, %v738
    %v740 = vpop.f32.mrf.mxu0
    %v741 = vadd.f32 0.0, %v740
    %v742 = vpop.f32.mrf.mxu0
    %v743 = vpop.f32.mrf.mxu0
    %744 = vdwg.mxu0
    %745 = vmatprep.subr.bf16.mxu0 0
    %746 = vmatpush1.bf16.msra.mxu0 0
    %747 = vmatprep.subr.bf16.mxu0 0
    %748 = vmatpush1.bf16.msra.mxu0 0
    %749 = vmatprep.subr.bf16.mxu0 0
    %750 = vmatpush1.bf16.msra.mxu0 0
    %751 = vmatprep.subr.bf16.mxu0 0
    %752 = vmatpush1.bf16.msra.mxu0 0
    %753 = vmatprep.subr.bf16.mxu0 0
    %754 = vmatpush1.bf16.msra.mxu0 0
    %755 = vmatprep.subr.bf16.mxu0 %v688
    %756 = vmatpush1.bf16.msra.mxu0 %v687
    %757 = vmatprep.subr.bf16.mxu0 %v684
    %758 = vmatpush1.bf16.msra.mxu0 %v683
    %759 = vmatprep.subr.bf16.mxu0 %v680
    %760 = vmatpush1.bf16.msra.mxu0 %v679
    %761 = vmatprep.subr.bf16.mxu0 0
    %762 = vmatpush2.bf16.msra.mxu0 0
    %763 = vmatprep.subr.bf16.mxu0 0
    %764 = vmatpush2.bf16.msra.mxu0 0
    %765 = vmatprep.subr.bf16.mxu0 0
    %766 = vmatpush2.bf16.msra.mxu0 0
    %767 = vmatprep.subr.bf16.mxu0 0
    %768 = vmatpush2.bf16.msra.mxu0 0
    %769 = vmatprep.subr.bf16.mxu0 0
    %770 = vmatpush2.bf16.msra.mxu0 0
    %771 = vmatprep.subr.bf16.mxu0 0
    %772 = vmatpush2.bf16.msra.mxu0 0
    %773 = vmatprep.subr.bf16.mxu0 0
    %774 = vmatpush2.bf16.msra.mxu0 0
    %775 = vmatprep.subr.bf16.mxu0 0
    %776 = vmatpush2.bf16.msra.mxu0 0
    %777 = vmatprep.mubr.bf16.mxu0 0
    %778 = vmatmul.mubr.bf16.gmra.mxu0 %v702
    %v779 = vpop.f32.mrf.mxu0
    %v780 = vadd.f32 0.0, %v779
    %v781 = vpop.f32.mrf.mxu0
    %v782 = vadd.f32 0.0, %v781
    %v783 = vpop.f32.mrf.mxu0
    %v784 = vpop.f32.mrf.mxu0
    %785 = vdwg.mxu0
    %v786 = vadd.f32 %v502, %v739
    %v787 = vadd.f32 %v504, %v741
    %v788 = vadd.f32 %v543, %v780
    %v789 = vadd.f32 %v545, %v782
    %v790 = vld [vmem:[%s3] sm:$0xf]
    %v792 = vlaneseq
    %v793 = vshrl.u32 %v792, 7
    %v794 = vsub.s32 0, %v793
    %v795 = vrot.slane %v790, %v794
    %v796 = vlaneseq
    %v797 = vshrl.u32 %v796, 7
    %v798 = vsub.s32 1, %v797
    %v799 = vrot.slane %v790, %v798
    %v800 = vlaneseq
    %v801 = vshrl.u32 %v800, 7
    %v802 = vsub.s32 2, %v801
    %v803 = vrot.slane %v790, %v802
    %v804 = vlaneseq
    %v805 = vshrl.u32 %v804, 7
    %v806 = vsub.s32 3, %v805
    %v807 = vrot.slane %v790, %v806
    %v812 = vadd.f32 %v786, %v795
    %v813 = vadd.f32 %v787, %v799
    %v814 = vadd.f32 %v788, %v803
    %v815 = vadd.f32 %v789, %v807
    %v816 = vtanh.pop %v812
    %v817 = vtanh.pop %v813
    %v818 = vtanh.pop %v814
    %v819 = vtanh.pop %v815
    %v820 = vpack.c.bf16 %v816, %v816
    %v821 = vpack.c.bf16 %v817, %v817
    %v822 = vpack.c.bf16 %v818, %v818
    %v823 = vpack.c.bf16 %v819, %v819
    %v824 = vld [vmem:[#allocation7] sm:$0xf]
    %v825 = vld [vmem:[#allocation7 + $0x4] sm:$0xf]
    %v826 = vld [vmem:[#allocation7 + $0x8] sm:$0xf]
    %v827 = vld [vmem:[#allocation7 + $0xc] sm:$0xf]
    %v828 = vld [vmem:[#allocation7 + $0x10] sm:$0xf]
    %v829 = vld [vmem:[#allocation7 + $0x14] sm:$0xf]
    %v830 = vld [vmem:[#allocation7 + $0x18] sm:$0xf]
    %v831 = vld [vmem:[#allocation7 + $0x1c] sm:$0xf]
    %v832 = vld [vmem:[#allocation7 + $0x20] sm:$0xf]
    %v833 = vld [vmem:[#allocation7 + $0x24] sm:$0xf]
    %v834 = vld [vmem:[#allocation7 + $0x28] sm:$0xf]
    %v835 = vld [vmem:[#allocation7 + $0x2c] sm:$0xf]
    %v836 = vld [vmem:[#allocation7 + $0x30] sm:$0xf]
    %v837 = vld [vmem:[#allocation7 + $0x34] sm:$0xf]
    %v838 = vld [vmem:[#allocation7 + $0x38] sm:$0xf]
    %v839 = vld [vmem:[#allocation7 + $0x3c] sm:$0xf]
    %v840 = vld [vmem:[#allocation7 + $0x40] sm:$0xf]
    %v841 = vld [vmem:[#allocation7 + $0x44] sm:$0xf]
    %v842 = vld [vmem:[#allocation7 + $0x48] sm:$0xf]
    %v843 = vld [vmem:[#allocation7 + $0x4c] sm:$0xf]
    %v844 = vld [vmem:[#allocation7 + $0x50] sm:$0xf]
    %v845 = vld [vmem:[#allocation7 + $0x54] sm:$0xf]
    %v846 = vld [vmem:[#allocation7 + $0x58] sm:$0xf]
    %v847 = vld [vmem:[#allocation7 + $0x5c] sm:$0xf]
    %v848 = vld [vmem:[#allocation7 + $0x60] sm:$0xf]
    %v849 = vld [vmem:[#allocation7 + $0x64] sm:$0xf]
    %v850 = vld [vmem:[#allocation7 + $0x68] sm:$0xf]
    %v851 = vld [vmem:[#allocation7 + $0x6c] sm:$0xf]
    %v852 = vld [vmem:[#allocation7 + $0x70] sm:$0xf]
    %v853 = vld [vmem:[#allocation7 + $0x74] sm:$0xf]
    %v854 = vld [vmem:[#allocation7 + $0x78] sm:$0xf]
    %v855 = vld [vmem:[#allocation7 + $0x7c] sm:$0xf]
    %v856 = vld [vmem:[#allocation7 + $0x80] sm:$0xf]
    %v857 = vld [vmem:[#allocation7 + $0x84] sm:$0xf]
    %v858 = vld [vmem:[#allocation7 + $0x88] sm:$0xf]
    %v859 = vld [vmem:[#allocation7 + $0x8c] sm:$0xf]
    %v860 = vld [vmem:[#allocation7 + $0x90] sm:$0xf]
    %v861 = vld [vmem:[#allocation7 + $0x94] sm:$0xf]
    %v862 = vld [vmem:[#allocation7 + $0x98] sm:$0xf]
    %v863 = vld [vmem:[#allocation7 + $0x9c] sm:$0xf]
    %v864 = vld [vmem:[#allocation7 + $0xa0] sm:$0xf]
    %v865 = vld [vmem:[#allocation7 + $0xa4] sm:$0xf]
    %v866 = vld [vmem:[#allocation7 + $0xa8] sm:$0xf]
    %v867 = vld [vmem:[#allocation7 + $0xac] sm:$0xf]
    %v868 = vld [vmem:[#allocation7 + $0xb0] sm:$0xf]
    %v869 = vld [vmem:[#allocation7 + $0xb4] sm:$0xf]
    %v870 = vld [vmem:[#allocation7 + $0xb8] sm:$0xf]
    %v871 = vld [vmem:[#allocation7 + $0xbc] sm:$0xf]
    %v872 = vld [vmem:[#allocation7 + $0xc0] sm:$0xf]
    %v873 = vld [vmem:[#allocation7 + $0xc4] sm:$0xf]
    %v874 = vld [vmem:[#allocation7 + $0xc8] sm:$0xf]
    %v875 = vld [vmem:[#allocation7 + $0xcc] sm:$0xf]
    %v876 = vld [vmem:[#allocation7 + $0xd0] sm:$0xf]
    %v877 = vld [vmem:[#allocation7 + $0xd4] sm:$0xf]
    %v878 = vld [vmem:[#allocation7 + $0xd8] sm:$0xf]
    %v879 = vld [vmem:[#allocation7 + $0xdc] sm:$0xf]
    %v880 = vld [vmem:[#allocation7 + $0xe0] sm:$0xf]
    %v881 = vld [vmem:[#allocation7 + $0xe4] sm:$0xf]
    %v882 = vld [vmem:[#allocation7 + $0xe8] sm:$0xf]
    %v883 = vld [vmem:[#allocation7 + $0xec] sm:$0xf]
    %v884 = vld [vmem:[#allocation7 + $0xf0] sm:$0xf]
    %v885 = vld [vmem:[#allocation7 + $0xf4] sm:$0xf]
    %v886 = vld [vmem:[#allocation7 + $0xf8] sm:$0xf]
    %v887 = vld [vmem:[#allocation7 + $0xfc] sm:$0xf]
    %v888 = vld [vmem:[%s5] sm:$0x1]
    %v890 = vlaneseq
    %v891 = vshrl.u32 %v890, 7
    %v892 = vsub.s32 0, %v891
    %v893 = vrot.slane %v888, %v892
    %v959 = vunpack.c.l.b16 %v824
    %v960 = vunpack.c.l.b16 %v825
    %v961 = vunpack.c.l.b16 %v826
    %v962 = vunpack.c.l.b16 %v827
    %v963 = vunpack.c.l.b16 %v828
    %v964 = vunpack.c.l.b16 %v829
    %v965 = vunpack.c.l.b16 %v830
    %v966 = vunpack.c.l.b16 %v831
    %v967 = vunpack.c.l.b16 %v832
    %v968 = vunpack.c.l.b16 %v833
    %v969 = vunpack.c.l.b16 %v834
    %v970 = vunpack.c.l.b16 %v835
    %v971 = vunpack.c.l.b16 %v836
    %v972 = vunpack.c.l.b16 %v837
    %v973 = vunpack.c.l.b16 %v838
    %v974 = vunpack.c.l.b16 %v839
    %v975 = vunpack.c.l.b16 %v840
    %v976 = vunpack.c.l.b16 %v841
    %v977 = vunpack.c.l.b16 %v842
    %v978 = vunpack.c.l.b16 %v843
    %v979 = vunpack.c.l.b16 %v844
    %v980 = vunpack.c.l.b16 %v845
    %v981 = vunpack.c.l.b16 %v846
    %v982 = vunpack.c.l.b16 %v847
    %v983 = vunpack.c.l.b16 %v848
    %v984 = vunpack.c.l.b16 %v849
    %v985 = vunpack.c.l.b16 %v850
    %v986 = vunpack.c.l.b16 %v851
    %v987 = vunpack.c.l.b16 %v852
    %v988 = vunpack.c.l.b16 %v853
    %v989 = vunpack.c.l.b16 %v854
    %v990 = vunpack.c.l.b16 %v855
    %v991 = vunpack.c.l.b16 %v856
    %v992 = vunpack.c.l.b16 %v857
    %v993 = vunpack.c.l.b16 %v858
    %v994 = vunpack.c.l.b16 %v859
    %v995 = vunpack.c.l.b16 %v860
    %v996 = vunpack.c.l.b16 %v861
    %v997 = vunpack.c.l.b16 %v862
    %v998 = vunpack.c.l.b16 %v863
    %v999 = vunpack.c.l.b16 %v864
    %v1000 = vunpack.c.l.b16 %v865
    %v1001 = vunpack.c.l.b16 %v866
    %v1002 = vunpack.c.l.b16 %v867
    %v1003 = vunpack.c.l.b16 %v868
    %v1004 = vunpack.c.l.b16 %v869
    %v1005 = vunpack.c.l.b16 %v870
    %v1006 = vunpack.c.l.b16 %v871
    %v1007 = vunpack.c.l.b16 %v872
    %v1008 = vunpack.c.l.b16 %v873
    %v1009 = vunpack.c.l.b16 %v874
    %v1010 = vunpack.c.l.b16 %v875
    %v1011 = vunpack.c.l.b16 %v876
    %v1012 = vunpack.c.l.b16 %v877
    %v1013 = vunpack.c.l.b16 %v878
    %v1014 = vunpack.c.l.b16 %v879
    %v1015 = vunpack.c.l.b16 %v880
    %v1016 = vunpack.c.l.b16 %v881
    %v1017 = vunpack.c.l.b16 %v882
    %v1018 = vunpack.c.l.b16 %v883
    %v1019 = vunpack.c.l.b16 %v884
    %v1020 = vunpack.c.l.b16 %v885
    %v1021 = vunpack.c.l.b16 %v886
    %v1022 = vunpack.c.l.b16 %v887
    %v1023 = vpack.c.b16 %v960, %v959
    %v1024 = vpack.c.b16 %v962, %v961
    %v1025 = vpack.c.b16 %v964, %v963
    %v1026 = vpack.c.b16 %v966, %v965
    %v1027 = vpack.c.b16 %v968, %v967
    %v1028 = vpack.c.b16 %v970, %v969
    %v1029 = vpack.c.b16 %v972, %v971
    %v1030 = vpack.c.b16 %v974, %v973
    %v1031 = vpack.c.b16 %v976, %v975
    %v1032 = vpack.c.b16 %v978, %v977
    %v1033 = vpack.c.b16 %v980, %v979
    %v1034 = vpack.c.b16 %v982, %v981
    %v1035 = vpack.c.b16 %v984, %v983
    %v1036 = vpack.c.b16 %v986, %v985
    %v1037 = vpack.c.b16 %v988, %v987
    %v1038 = vpack.c.b16 %v990, %v989
    %v1039 = vpack.c.b16 %v992, %v991
    %v1040 = vpack.c.b16 %v994, %v993
    %v1041 = vpack.c.b16 %v996, %v995
    %v1042 = vpack.c.b16 %v998, %v997
    %v1043 = vpack.c.b16 %v1000, %v999
    %v1044 = vpack.c.b16 %v1002, %v1001
    %v1045 = vpack.c.b16 %v1004, %v1003
    %v1046 = vpack.c.b16 %v1006, %v1005
    %v1047 = vpack.c.b16 %v1008, %v1007
    %v1048 = vpack.c.b16 %v1010, %v1009
    %v1049 = vpack.c.b16 %v1012, %v1011
    %v1050 = vpack.c.b16 %v1014, %v1013
    %v1051 = vpack.c.b16 %v1016, %v1015
    %v1052 = vpack.c.b16 %v1018, %v1017
    %v1053 = vpack.c.b16 %v1020, %v1019
    %v1054 = vpack.c.b16 %v1022, %v1021
    %1087 = vmatprep.subr.bf16.mxu0 0
    %1088 = vmatpush1.bf16.msra.mxu0 %v1030
    %1089 = vmatprep.subr.bf16.mxu0 0
    %1090 = vmatpush1.bf16.msra.mxu0 %v1029
    %1091 = vmatprep.subr.bf16.mxu0 0
    %1092 = vmatpush1.bf16.msra.mxu0 %v1028
    %1093 = vmatprep.subr.bf16.mxu0 0
    %1094 = vmatpush1.bf16.msra.mxu0 %v1027
    %1095 = vmatprep.subr.bf16.mxu0 0
    %1096 = vmatpush1.bf16.msra.mxu0 %v1026
    %1097 = vmatprep.subr.bf16.mxu0 0
    %1098 = vmatpush1.bf16.msra.mxu0 %v1025
    %1099 = vmatprep.subr.bf16.mxu0 0
    %1100 = vmatpush1.bf16.msra.mxu0 %v1024
    %1101 = vmatprep.subr.bf16.mxu0 0
    %1102 = vmatpush1.bf16.msra.mxu0 %v1023
    %1103 = vmatprep.subr.bf16.mxu0 0
    %1104 = vmatpush2.bf16.msra.mxu0 %v1038
    %1105 = vmatprep.subr.bf16.mxu0 0
    %1106 = vmatpush2.bf16.msra.mxu0 %v1037
    %1107 = vmatprep.subr.bf16.mxu0 0
    %1108 = vmatpush2.bf16.msra.mxu0 %v1036
    %1109 = vmatprep.subr.bf16.mxu0 0
    %1110 = vmatpush2.bf16.msra.mxu0 %v1035
    %1111 = vmatprep.subr.bf16.mxu0 0
    %1112 = vmatpush2.bf16.msra.mxu0 %v1034
    %1113 = vmatprep.subr.bf16.mxu0 0
    %1114 = vmatpush2.bf16.msra.mxu0 %v1033
    %1115 = vmatprep.subr.bf16.mxu0 0
    %1116 = vmatpush2.bf16.msra.mxu0 %v1032
    %1117 = vmatprep.subr.bf16.mxu0 0
    %1118 = vmatpush2.bf16.msra.mxu0 %v1031
    %1119 = vmatprep.mubr.bf16.mxu0 %v821
    %1120 = vmatmul.mubr.bf16.gmra.mxu0 %v820
    %v1121 = vpop.f32.mrf.mxu0
    %v1122 = vadd.f32 %v893, %v1121
    %v1123 = vpop.f32.mrf.mxu0
    %v1124 = vpop.f32.mrf.mxu0
    %v1125 = vpop.f32.mrf.mxu0
    %1126 = vdwg.mxu0
    %1127 = vmatprep.subr.bf16.mxu0 0
    %1128 = vmatpush1.bf16.msra.mxu0 %v1046
    %1129 = vmatprep.subr.bf16.mxu0 0
    %1130 = vmatpush1.bf16.msra.mxu0 %v1045
    %1131 = vmatprep.subr.bf16.mxu0 0
    %1132 = vmatpush1.bf16.msra.mxu0 %v1044
    %1133 = vmatprep.subr.bf16.mxu0 0
    %1134 = vmatpush1.bf16.msra.mxu0 %v1043
    %1135 = vmatprep.subr.bf16.mxu0 0
    %1136 = vmatpush1.bf16.msra.mxu0 %v1042
    %1137 = vmatprep.subr.bf16.mxu0 0
    %1138 = vmatpush1.bf16.msra.mxu0 %v1041
    %1139 = vmatprep.subr.bf16.mxu0 0
    %1140 = vmatpush1.bf16.msra.mxu0 %v1040
    %1141 = vmatprep.subr.bf16.mxu0 0
    %1142 = vmatpush1.bf16.msra.mxu0 %v1039
    %1143 = vmatprep.subr.bf16.mxu0 0
    %1144 = vmatpush2.bf16.msra.mxu0 %v1054
    %1145 = vmatprep.subr.bf16.mxu0 0
    %1146 = vmatpush2.bf16.msra.mxu0 %v1053
    %1147 = vmatprep.subr.bf16.mxu0 0
    %1148 = vmatpush2.bf16.msra.mxu0 %v1052
    %1149 = vmatprep.subr.bf16.mxu0 0
    %1150 = vmatpush2.bf16.msra.mxu0 %v1051
    %1151 = vmatprep.subr.bf16.mxu0 0
    %1152 = vmatpush2.bf16.msra.mxu0 %v1050
    %1153 = vmatprep.subr.bf16.mxu0 0
    %1154 = vmatpush2.bf16.msra.mxu0 %v1049
    %1155 = vmatprep.subr.bf16.mxu0 0
    %1156 = vmatpush2.bf16.msra.mxu0 %v1048
    %1157 = vmatprep.subr.bf16.mxu0 0
    %1158 = vmatpush2.bf16.msra.mxu0 %v1047
    %1159 = vmatprep.mubr.bf16.mxu0 %v823
    %1160 = vmatmul.mubr.bf16.gmra.mxu0 %v822
    %v1161 = vpop.f32.mrf.mxu0
    %v1162 = vadd.f32 %v1122, %v1161
    %v1163 = vpop.f32.mrf.mxu0
    %v1164 = vpop.f32.mrf.mxu0
    %v1165 = vpop.f32.mrf.mxu0
    %1166 = vdwg.mxu0
    %1167 = vst [vmem:[#allocation8] sm:$0xff] %v1162
    // Predicated region
    $region38: #{tpu_custom_call.1} parent=1 // pred_check
      _
    $region39: #{tpu_custom_call.1} parent=1 // pred_check_branch
      %1169 = sbr.rel (0) target = $region41
    $region40: #{tpu_custom_call.1} parent=1 // pred_region
      %s1171 = ssub.s32 128, 128
      %1172 = vsyncadd [#allocation4], %s1171
      %s1174 = sshll.u32 [#allocation8], 4
      %s1175 = int_to_ptr.vmem [resolvable:$true] %s1174
      %1177 = dma.vmem_to_hbm [thread:$0]  %s1175, 128, %s6, [#allocation4]
    $region41: #{tpu_custom_call.1} parent=1 // pred_fallthru
      _
    // Predicated region
    $region42: #{tpu_custom_call.1} parent=1 // pred_check
      _
    $region43: #{tpu_custom_call.1} parent=1 // pred_check_branch
      %1179 = sbr.rel (0) target = $region45
    $region44: #{tpu_custom_call.1} parent=1 // pred_region
      %1180 = dma.done [#allocation4], 128
    $region45: #{tpu_custom_call.1} parent=1 // pred_fallthru
      _
    %1181 = vsyncpa [#allocation3], 1
    %1182 = vsyncpa [#allocation6], 1
    %1183 = vsyncpa [#allocation4], 1

</llo_original>
